<compile_context>
chip_gen: v5e
topology: v5e:2x2
jax: 0.10.0
libtpu: 0.0.40
codegen_flags: <defaults>
</compile_context>

<pallas_src>
import functools

import jax
import jax.numpy as jnp
import numpy as np
from jax import lax
from jax.experimental import pallas as pl
from jax.experimental.pallas import tpu as pltpu


# ---------------------------------------------------------------------------
# Fused kernel: qkv projection -> per-head attention -> hardswish -> proj
# ---------------------------------------------------------------------------
def _fused_attention_kernel(x_ref, wqkv_ref, bqkv_ref, wproj_ref, bproj_ref,
                            o_ref, head_scratch, *, num_heads):
    # x_ref:        (Bt, N, C)   slab of Bt batch elements
    # wqkv_ref:     (C, 3C) bf16  BN scale + attention scale (q cols) folded in
    # bqkv_ref:     (1, 3C) f32   folded BN shift (q columns pre-scaled)
    # wproj_ref:    (C, C)  bf16  BN scale folded in
    # bproj_ref:    (1, C)  f32   folded BN shift
    # head_scratch: (Bt*N, C) f32 VMEM scratch for the concatenated head outputs
    Bt, N, C = x_ref.shape
    H = num_heads
    hd = C // H
    M = Bt * N

    # Flatten the slab to (Bt*N, C) rows: one tall matmul instead of Bt short ones.
    x = x_ref[...].reshape(M, C).astype(jnp.bfloat16)

    # ---- qkv = LinearNorm(dim, 3*dim)  (BN folded; bf16 MXU, f32 acc) -------
    qkv = jnp.dot(x, wqkv_ref[...], preferred_element_type=jnp.float32)
    qkv = qkv + bqkv_ref[...]                                     # (M, 3C) f32

    # ---- per-head softmax attention ----------------------------------------
    # Bt and H are tiny (trace-time unrolled).  Each head writes its normalized
    # output directly into the scratch slab (no concatenate, low vreg pressure).
    for b in range(Bt):
        rows = slice(b * N, (b + 1) * N)
        for h in range(H):
            cols = slice(h * hd, (h + 1) * hd)
            qh = qkv[rows, cols].astype(jnp.bfloat16)               # (N, hd), already *scale
            kh = qkv[rows, C + h * hd:C + (h + 1) * hd].astype(jnp.bfloat16)
            vh = qkv[rows, 2 * C + h * hd:2 * C + (h + 1) * hd].astype(jnp.bfloat16)
            # Contract on the last dims: no materialized kh.T / XLU transpose.
            s = lax.dot_general(qh, kh, (((1,), (1,)), ((), ())),
                                preferred_element_type=jnp.float32)  # (N, N)
            m = jnp.max(s, axis=-1, keepdims=True)
            # exp kept in f32 (v5e has no bf16 EUP; on v6e/v7x a bf16 exponent
            # would roughly double EUP throughput at the cost of precision).
            p = jnp.exp(s - m)
            denom = jnp.sum(p, axis=-1, keepdims=True)              # (N, 1), >= 1
            oh = jnp.dot(p.astype(jnp.bfloat16), vh,
                         preferred_element_type=jnp.float32)        # (N, hd)
            # Deferred softmax normalization on the small (N, hd) output;
            # reciprocal goes to the EUP slot.
            head_scratch[rows, cols] = oh * pl.reciprocal(denom, approx=True)

    # ---- proj = Hardswish -> LinearNorm(dim, dim)  (BN folded) -------------
    o = head_scratch[...]                                          # (M, C) f32
    hs = o * jnp.clip(o + 3.0, 0.0, 6.0) * (1.0 / 6.0)
    y = jnp.dot(hs.astype(jnp.bfloat16), wproj_ref[...],
                preferred_element_type=jnp.float32) + bproj_ref[...]
    o_ref[...] = y.reshape(Bt, N, C)


# ---------------------------------------------------------------------------
# Wrapper: fold BN / attention scale, pick batch tile, single pallas_call
# ---------------------------------------------------------------------------
def fold_bn(gamma, beta, mean, var, eps=1e-5):
    # Inference-mode BatchNorm1d as a per-channel affine: y = x * s + shift.
    s = gamma / jnp.sqrt(var + eps)
    return s, beta - mean * s


def _pick_batch_tile(B, N, rows_target=256):
    # Feed ~rows_target rows (Bt*N) per grid step so the MXU's 256-row systolic
    # height (v6e/v7x; 128 on v5e) isn't starved, but keep >=2 grid steps when
    # B allows it so both v7x TensorCores get a parallel partition.
    bt = max(1, min(B, rows_target // max(N, 1)))
    while B % bt:                      # exact grid, no ragged tail
        bt -= 1
    if B >= 2 and B // bt < 2:
        bt = max(1, B // 2)
        while B % bt:
            bt -= 1
    return bt


def attention_forward(x, params, num_heads, rows_target=256):
    B, N, C = x.shape
    hd = C // num_heads
    scale = hd ** (-0.5)

    # ---- fold BN into the qkv weight/shift (trace-time constants) ----------
    qs, qb = fold_bn(*params["qkv_bn"])
    w_qkv = params["w_qkv"].T * qs[None, :]                       # (C, 3C)
    b_qkv = qb[None, :]                                           # (1, 3C)
    # Fold the attention scale into the q columns of weight + shift.
    col_scale = jnp.concatenate(
        [jnp.full((C,), scale, jnp.float32), jnp.ones((2 * C,), jnp.float32)])
    w_qkv = w_qkv * col_scale[None, :]
    b_qkv = b_qkv * col_scale[None, :]

    # ---- fold BN into the proj weight/shift ---------------------------------
    ps, pb = fold_bn(*params["proj_bn"])
    w_proj = params["w_proj"].T * ps[None, :]                     # (C, C)
    b_proj = pb[None, :]                                          # (1, C)

    # Weights as bf16 (MXU-native, half VMEM/DMA); shifts stay f32 (added post-acc).
    w_qkv = w_qkv.astype(jnp.bfloat16)
    w_proj = w_proj.astype(jnp.bfloat16)
    b_qkv = b_qkv.astype(jnp.float32)
    b_proj = b_proj.astype(jnp.float32)

    bt = _pick_batch_tile(B, N, rows_target)
    grid = (B // bt,)

    kernel = functools.partial(_fused_attention_kernel, num_heads=num_heads)
    resident = lambda i: (0, 0)   # grid-constant: Pallas DMAs these only once

    # Rough VMEM budget: double-buffered x/out blocks, resident weights (x2
    # pipeline buffers), scratch + in-kernel temporaries, then 2x headroom.
    # Re-derive this when scaling Bt / N / C to real LeViT sizes on v7x (64 MiB).
    block_bytes = bt * N * C * 4
    weight_bytes = (C * 3 * C + C * C) * 2 + (3 * C + C) * 4
    temp_bytes = bt * N * (3 * C) * 4 + bt * N * C * 4
    vmem_bytes = 2 * (2 * 2 * block_bytes + 2 * weight_bytes + temp_bytes)
    vmem_limit = int(min(max(vmem_bytes, 16 * 2**20), 48 * 2**20))

    return pl.pallas_call(
        kernel,
        out_shape=jax.ShapeDtypeStruct((B, N, C), jnp.float32),
        grid=grid,
        in_specs=[
            pl.BlockSpec((bt, N, C), lambda i: (i, 0, 0)),
            # TODO(synk): at real LeViT sizes add pipeline_mode=pl.Buffered(1)
            # on these grid-constant weight specs to drop their unused second
            # pipeline buffer and free VMEM headroom (most valuable on v7x).
            pl.BlockSpec((C, 3 * C), resident),
            pl.BlockSpec((1, 3 * C), resident),
            pl.BlockSpec((C, C), resident),
            pl.BlockSpec((1, C), resident),
        ],
        # At real LeViT widths (C = 128..384) the last block dim is >=128 lanes,
        # so this output store is lane-dense; at the C=32 toy size it falls back
        # to masked partial stores (negligible at this scale).
        out_specs=pl.BlockSpec((bt, N, C), lambda i: (i, 0, 0)),
        scratch_shapes=[pltpu.VMEM((bt * N, C), jnp.float32)],
        compiler_params=pltpu.CompilerParams(
            dimension_semantics=("parallel",),
            vmem_limit_bytes=vmem_limit),
    )(x, w_qkv, b_qkv, w_proj, b_proj)


# ---------------------------------------------------------------------------
# Pure-JAX reference (mirrors the PyTorch module, BN in inference mode)
# ---------------------------------------------------------------------------
def reference_forward(x, params, num_heads):
    B, N, C = x.shape
    H, hd = num_heads, C // num_heads
    scale = hd ** (-0.5)
    qs, qb = fold_bn(*params["qkv_bn"])
    qkv = x.reshape(B * N, C) @ params["w_qkv"].T * qs + qb
    qkv = qkv.reshape(B, N, 3, H, hd).transpose(2, 0, 3, 1, 4)
    q, k, v = qkv[0], qkv[1], qkv[2]
    attn = jax.nn.softmax(jnp.einsum("bhnd,bhmd->bhnm", q, k) * scale, axis=-1)
    o = jnp.einsum("bhnm,bhmd->bhnd", attn, v).transpose(0, 2, 1, 3).reshape(B, N, C)
    hs = o * jnp.clip(o + 3.0, 0.0, 6.0) / 6.0
    ps, pb = fold_bn(*params["proj_bn"])
    return (hs.reshape(B * N, C) @ params["w_proj"].T * ps + pb).reshape(B, N, C)


if __name__ == "__main__":
    B, N, dim, num_heads = 2, 16, 32, 4
    key = jax.random.PRNGKey(0)
    ks = jax.random.split(key, 10)

    x = jax.random.normal(ks[0], (B, N, dim), dtype=jnp.float32)

    params = {
        # nn.Linear(dim, 3*dim, bias=False).weight -> (3*dim, dim)
        "w_qkv": jax.random.normal(ks[1], (3 * dim, dim), dtype=jnp.float32) * 0.1,
        # BatchNorm1d(3*dim): gamma, beta, running_mean, running_var
        "qkv_bn": (
            1.0 + 0.1 * jax.random.normal(ks[2], (3 * dim,), dtype=jnp.float32),
            0.1 * jax.random.normal(ks[3], (3 * dim,), dtype=jnp.float32),
            0.1 * jax.random.normal(ks[4], (3 * dim,), dtype=jnp.float32),
            jnp.abs(jax.random.normal(ks[5], (3 * dim,), dtype=jnp.float32)) + 0.5,
        ),
        # nn.Linear(dim, dim, bias=False).weight -> (dim, dim)
        "w_proj": jax.random.normal(ks[6], (dim, dim), dtype=jnp.float32) * 0.1,
        "proj_bn": (
            1.0 + 0.1 * jax.random.normal(ks[7], (dim,), dtype=jnp.float32),
            0.1 * jax.random.normal(ks[8], (dim,), dtype=jnp.float32),
            0.1 * jax.random.normal(ks[9], (dim,), dtype=jnp.float32),
            jnp.abs(jax.random.normal(ks[5], (dim,), dtype=jnp.float32)) + 0.5,
        ),
    }

    out = attention_forward(x, params, num_heads)
    out = jax.block_until_ready(out)

    ref = reference_forward(x, params, num_heads)
    # Tolerance accounts for bf16 MXU operands (f32 accumulation) and the
    # approximate (EUP) reciprocal used for the softmax normalization.
    np.testing.assert_allclose(np.asarray(out), np.asarray(ref), rtol=2e-2, atol=2e-2)

    print("KERNEL_OK")
</pallas_src>

<mosaic_0001>
module attributes {stable_mosaic.version = 11 : i64} {
  func.func @_fused_attention_kernel(%arg0: i32, %arg1: memref<1x16x32xf32, #tpu.memory_space<vmem>>, %arg2: memref<32x96xbf16, #tpu.memory_space<vmem>>, %arg3: memref<1x96xf32, #tpu.memory_space<vmem>>, %arg4: memref<32x32xbf16, #tpu.memory_space<vmem>>, %arg5: memref<1x32xf32, #tpu.memory_space<vmem>>, %arg6: memref<1x16x32xf32, #tpu.memory_space<vmem>>, %arg7: memref<16x32xf32, #tpu.memory_space<vmem>>) attributes {dimension_semantics = [#tpu.dimension_semantics<parallel>], iteration_bounds = array<i64: 2>, scalar_prefetch = 0 : i64, scratch_operands = 1 : i64, tpu.core_type = #tpu.core_type<tc>, window_params = [{transform_indices = @transform_0, window_bounds = array<i64: 1, 16, 32>}, {pipeline_mode = #tpu.pipeline_mode<synchronous>, transform_indices = @transform_1, window_bounds = array<i64: 32, 96>}, {pipeline_mode = #tpu.pipeline_mode<synchronous>, transform_indices = @transform_2, window_bounds = array<i64: 1, 96>}, {pipeline_mode = #tpu.pipeline_mode<synchronous>, transform_indices = @transform_3, window_bounds = array<i64: 32, 32>}, {pipeline_mode = #tpu.pipeline_mode<synchronous>, transform_indices = @transform_4, window_bounds = array<i64: 1, 32>}, {transform_indices = @transform_5, window_bounds = array<i64: 1, 16, 32>}]} {
    %c0 = arith.constant 0 : index
    %c0_0 = arith.constant 0 : index
    %c0_1 = arith.constant 0 : index
    %0 = vector.load %arg1[%c0, %c0_0, %c0_1] : memref<1x16x32xf32, #tpu.memory_space<vmem>>, vector<1x16x32xf32>
    %1 = vector.shape_cast %0 : vector<1x16x32xf32> to vector<16x32xf32>
    %2 = arith.truncf %1 : vector<16x32xf32> to vector<16x32xbf16>
    %c0_2 = arith.constant 0 : index
    %c0_3 = arith.constant 0 : index
    %3 = vector.load %arg2[%c0_2, %c0_3] : memref<32x96xbf16, #tpu.memory_space<vmem>>, vector<32x96xbf16>
    %cst = arith.constant dense<0.000000e+00> : vector<16x96xf32>
    %4 = tpu.matmul %2, %3, %cst {dimension_numbers = #tpu.dot_dimension_numbers<[1], [0], [0], [1], [0, 0, 1, 1], [], []>} : vector<16x32xbf16>, vector<32x96xbf16>, vector<16x96xf32> -> vector<16x96xf32>
    %c0_4 = arith.constant 0 : index
    %c0_5 = arith.constant 0 : index
    %5 = vector.load %arg3[%c0_4, %c0_5] : memref<1x96xf32, #tpu.memory_space<vmem>>, vector<1x96xf32>
    %6 = vector.broadcast %5 : vector<1x96xf32> to vector<16x96xf32>
    %7 = arith.addf %4, %6 : vector<16x96xf32>
    %8 = vector.extract_strided_slice %7 {offsets = [0, 0], sizes = [16, 8], strides = [1, 1]} : vector<16x96xf32> to vector<16x8xf32>
    %9 = arith.truncf %8 : vector<16x8xf32> to vector<16x8xbf16>
    %10 = vector.extract_strided_slice %7 {offsets = [0, 32], sizes = [16, 8], strides = [1, 1]} : vector<16x96xf32> to vector<16x8xf32>
    %11 = arith.truncf %10 : vector<16x8xf32> to vector<16x8xbf16>
    %12 = vector.extract_strided_slice %7 {offsets = [0, 64], sizes = [16, 8], strides = [1, 1]} : vector<16x96xf32> to vector<16x8xf32>
    %13 = arith.truncf %12 : vector<16x8xf32> to vector<16x8xbf16>
    %cst_6 = arith.constant dense<0.000000e+00> : vector<16x16xf32>
    %14 = tpu.matmul %9, %11, %cst_6 {dimension_numbers = #tpu.dot_dimension_numbers<[1], [1], [0], [0], [0, 0, 1, 0], [], []>} : vector<16x8xbf16>, vector<16x8xbf16>, vector<16x16xf32> -> vector<16x16xf32>
    %cst_7 = arith.constant dense<0xFF800000> : vector<16xf32>
    %15 = vector.multi_reduction <maximumf>, %14, %cst_7 [1] : vector<16x16xf32> to vector<16xf32>
    %16 = vector.shape_cast %15 : vector<16xf32> to vector<16x1xf32>
    %17 = vector.broadcast %16 : vector<16x1xf32> to vector<16x16xf32>
    %18 = arith.subf %14, %17 : vector<16x16xf32>
    %19 = math.exp %18 : vector<16x16xf32>
    %cst_8 = arith.constant dense<0.000000e+00> : vector<16xf32>
    %20 = vector.multi_reduction <add>, %19, %cst_8 [1] : vector<16x16xf32> to vector<16xf32>
    %21 = vector.shape_cast %20 : vector<16xf32> to vector<16x1xf32>
    %22 = arith.truncf %19 : vector<16x16xf32> to vector<16x16xbf16>
    %cst_9 = arith.constant dense<0.000000e+00> : vector<16x8xf32>
    %23 = tpu.matmul %22, %13, %cst_9 {dimension_numbers = #tpu.dot_dimension_numbers<[1], [0], [0], [1], [0, 0, 1, 1], [], []>} : vector<16x16xbf16>, vector<16x8xbf16>, vector<16x8xf32> -> vector<16x8xf32>
    %24 = tpu.reciprocal %21 {approx = true} : vector<16x1xf32> -> vector<16x1xf32>
    %25 = vector.broadcast %24 : vector<16x1xf32> to vector<16x8xf32>
    %26 = arith.mulf %23, %25 : vector<16x8xf32>
    %c0_10 = arith.constant 0 : index
    %c0_11 = arith.constant 0 : index
    %27 = vector.load %arg7[%c0_10, %c0_11] : memref<16x32xf32, #tpu.memory_space<vmem>>, vector<16x8xf32>
    tpu.vector_store %arg7[%c0_10, %c0_11], %26 {strides = array<i32>} : memref<16x32xf32, #tpu.memory_space<vmem>>, vector<16x8xf32>,
    %28 = vector.extract_strided_slice %7 {offsets = [0, 8], sizes = [16, 8], strides = [1, 1]} : vector<16x96xf32> to vector<16x8xf32>
    %29 = arith.truncf %28 : vector<16x8xf32> to vector<16x8xbf16>
    %30 = vector.extract_strided_slice %7 {offsets = [0, 40], sizes = [16, 8], strides = [1, 1]} : vector<16x96xf32> to vector<16x8xf32>
    %31 = arith.truncf %30 : vector<16x8xf32> to vector<16x8xbf16>
    %32 = vector.extract_strided_slice %7 {offsets = [0, 72], sizes = [16, 8], strides = [1, 1]} : vector<16x96xf32> to vector<16x8xf32>
    %33 = arith.truncf %32 : vector<16x8xf32> to vector<16x8xbf16>
    %cst_12 = arith.constant dense<0.000000e+00> : vector<16x16xf32>
    %34 = tpu.matmul %29, %31, %cst_12 {dimension_numbers = #tpu.dot_dimension_numbers<[1], [1], [0], [0], [0, 0, 1, 0], [], []>} : vector<16x8xbf16>, vector<16x8xbf16>, vector<16x16xf32> -> vector<16x16xf32>
    %cst_13 = arith.constant dense<0xFF800000> : vector<16xf32>
    %35 = vector.multi_reduction <maximumf>, %34, %cst_13 [1] : vector<16x16xf32> to vector<16xf32>
    %36 = vector.shape_cast %35 : vector<16xf32> to vector<16x1xf32>
    %37 = vector.broadcast %36 : vector<16x1xf32> to vector<16x16xf32>
    %38 = arith.subf %34, %37 : vector<16x16xf32>
    %39 = math.exp %38 : vector<16x16xf32>
    %cst_14 = arith.constant dense<0.000000e+00> : vector<16xf32>
    %40 = vector.multi_reduction <add>, %39, %cst_14 [1] : vector<16x16xf32> to vector<16xf32>
    %41 = vector.shape_cast %40 : vector<16xf32> to vector<16x1xf32>
    %42 = arith.truncf %39 : vector<16x16xf32> to vector<16x16xbf16>
    %cst_15 = arith.constant dense<0.000000e+00> : vector<16x8xf32>
    %43 = tpu.matmul %42, %33, %cst_15 {dimension_numbers = #tpu.dot_dimension_numbers<[1], [0], [0], [1], [0, 0, 1, 1], [], []>} : vector<16x16xbf16>, vector<16x8xbf16>, vector<16x8xf32> -> vector<16x8xf32>
    %44 = tpu.reciprocal %41 {approx = true} : vector<16x1xf32> -> vector<16x1xf32>
    %45 = vector.broadcast %44 : vector<16x1xf32> to vector<16x8xf32>
    %46 = arith.mulf %43, %45 : vector<16x8xf32>
    %c0_16 = arith.constant 0 : index
    %c8 = arith.constant 8 : index
    %47 = vector.load %arg7[%c0_16, %c8] : memref<16x32xf32, #tpu.memory_space<vmem>>, vector<16x8xf32>
    tpu.vector_store %arg7[%c0_16, %c8], %46 {strides = array<i32>} : memref<16x32xf32, #tpu.memory_space<vmem>>, vector<16x8xf32>,
    %48 = vector.extract_strided_slice %7 {offsets = [0, 16], sizes = [16, 8], strides = [1, 1]} : vector<16x96xf32> to vector<16x8xf32>
    %49 = arith.truncf %48 : vector<16x8xf32> to vector<16x8xbf16>
    %50 = vector.extract_strided_slice %7 {offsets = [0, 48], sizes = [16, 8], strides = [1, 1]} : vector<16x96xf32> to vector<16x8xf32>
    %51 = arith.truncf %50 : vector<16x8xf32> to vector<16x8xbf16>
    %52 = vector.extract_strided_slice %7 {offsets = [0, 80], sizes = [16, 8], strides = [1, 1]} : vector<16x96xf32> to vector<16x8xf32>
    %53 = arith.truncf %52 : vector<16x8xf32> to vector<16x8xbf16>
    %cst_17 = arith.constant dense<0.000000e+00> : vector<16x16xf32>
    %54 = tpu.matmul %49, %51, %cst_17 {dimension_numbers = #tpu.dot_dimension_numbers<[1], [1], [0], [0], [0, 0, 1, 0], [], []>} : vector<16x8xbf16>, vector<16x8xbf16>, vector<16x16xf32> -> vector<16x16xf32>
    %cst_18 = arith.constant dense<0xFF800000> : vector<16xf32>
    %55 = vector.multi_reduction <maximumf>, %54, %cst_18 [1] : vector<16x16xf32> to vector<16xf32>
    %56 = vector.shape_cast %55 : vector<16xf32> to vector<16x1xf32>
    %57 = vector.broadcast %56 : vector<16x1xf32> to vector<16x16xf32>
    %58 = arith.subf %54, %57 : vector<16x16xf32>
    %59 = math.exp %58 : vector<16x16xf32>
    %cst_19 = arith.constant dense<0.000000e+00> : vector<16xf32>
    %60 = vector.multi_reduction <add>, %59, %cst_19 [1] : vector<16x16xf32> to vector<16xf32>
    %61 = vector.shape_cast %60 : vector<16xf32> to vector<16x1xf32>
    %62 = arith.truncf %59 : vector<16x16xf32> to vector<16x16xbf16>
    %cst_20 = arith.constant dense<0.000000e+00> : vector<16x8xf32>
    %63 = tpu.matmul %62, %53, %cst_20 {dimension_numbers = #tpu.dot_dimension_numbers<[1], [0], [0], [1], [0, 0, 1, 1], [], []>} : vector<16x16xbf16>, vector<16x8xbf16>, vector<16x8xf32> -> vector<16x8xf32>
    %64 = tpu.reciprocal %61 {approx = true} : vector<16x1xf32> -> vector<16x1xf32>
    %65 = vector.broadcast %64 : vector<16x1xf32> to vector<16x8xf32>
    %66 = arith.mulf %63, %65 : vector<16x8xf32>
    %c0_21 = arith.constant 0 : index
    %c16 = arith.constant 16 : index
    %67 = vector.load %arg7[%c0_21, %c16] : memref<16x32xf32, #tpu.memory_space<vmem>>, vector<16x8xf32>
    tpu.vector_store %arg7[%c0_21, %c16], %66 {strides = array<i32>} : memref<16x32xf32, #tpu.memory_space<vmem>>, vector<16x8xf32>,
    %68 = vector.extract_strided_slice %7 {offsets = [0, 24], sizes = [16, 8], strides = [1, 1]} : vector<16x96xf32> to vector<16x8xf32>
    %69 = arith.truncf %68 : vector<16x8xf32> to vector<16x8xbf16>
    %70 = vector.extract_strided_slice %7 {offsets = [0, 56], sizes = [16, 8], strides = [1, 1]} : vector<16x96xf32> to vector<16x8xf32>
    %71 = arith.truncf %70 : vector<16x8xf32> to vector<16x8xbf16>
    %72 = vector.extract_strided_slice %7 {offsets = [0, 88], sizes = [16, 8], strides = [1, 1]} : vector<16x96xf32> to vector<16x8xf32>
    %73 = arith.truncf %72 : vector<16x8xf32> to vector<16x8xbf16>
    %cst_22 = arith.constant dense<0.000000e+00> : vector<16x16xf32>
    %74 = tpu.matmul %69, %71, %cst_22 {dimension_numbers = #tpu.dot_dimension_numbers<[1], [1], [0], [0], [0, 0, 1, 0], [], []>} : vector<16x8xbf16>, vector<16x8xbf16>, vector<16x16xf32> -> vector<16x16xf32>
    %cst_23 = arith.constant dense<0xFF800000> : vector<16xf32>
    %75 = vector.multi_reduction <maximumf>, %74, %cst_23 [1] : vector<16x16xf32> to vector<16xf32>
    %76 = vector.shape_cast %75 : vector<16xf32> to vector<16x1xf32>
    %77 = vector.broadcast %76 : vector<16x1xf32> to vector<16x16xf32>
    %78 = arith.subf %74, %77 : vector<16x16xf32>
    %79 = math.exp %78 : vector<16x16xf32>
    %cst_24 = arith.constant dense<0.000000e+00> : vector<16xf32>
    %80 = vector.multi_reduction <add>, %79, %cst_24 [1] : vector<16x16xf32> to vector<16xf32>
    %81 = vector.shape_cast %80 : vector<16xf32> to vector<16x1xf32>
    %82 = arith.truncf %79 : vector<16x16xf32> to vector<16x16xbf16>
    %cst_25 = arith.constant dense<0.000000e+00> : vector<16x8xf32>
    %83 = tpu.matmul %82, %73, %cst_25 {dimension_numbers = #tpu.dot_dimension_numbers<[1], [0], [0], [1], [0, 0, 1, 1], [], []>} : vector<16x16xbf16>, vector<16x8xbf16>, vector<16x8xf32> -> vector<16x8xf32>
    %84 = tpu.reciprocal %81 {approx = true} : vector<16x1xf32> -> vector<16x1xf32>
    %85 = vector.broadcast %84 : vector<16x1xf32> to vector<16x8xf32>
    %86 = arith.mulf %83, %85 : vector<16x8xf32>
    %c0_26 = arith.constant 0 : index
    %c24 = arith.constant 24 : index
    %87 = vector.load %arg7[%c0_26, %c24] : memref<16x32xf32, #tpu.memory_space<vmem>>, vector<16x8xf32>
    tpu.vector_store %arg7[%c0_26, %c24], %86 {strides = array<i32>} : memref<16x32xf32, #tpu.memory_space<vmem>>, vector<16x8xf32>,
    %c0_27 = arith.constant 0 : index
    %c0_28 = arith.constant 0 : index
    %88 = vector.load %arg7[%c0_27, %c0_28] : memref<16x32xf32, #tpu.memory_space<vmem>>, vector<16x32xf32>
    %cst_29 = arith.constant 3.000000e+00 : f32
    %89 = vector.broadcast %cst_29 : f32 to vector<16x32xf32>
    %90 = arith.addf %88, %89 : vector<16x32xf32>
    %cst_30 = arith.constant 0.000000e+00 : f32
    %cst_31 = arith.constant 6.000000e+00 : f32
    %91 = vector.broadcast %cst_30 : f32 to vector<16x32xf32>
    %92 = arith.maximumf %91, %90 : vector<16x32xf32>
    %93 = vector.broadcast %cst_31 : f32 to vector<16x32xf32>
    %94 = arith.minimumf %93, %92 : vector<16x32xf32>
    %95 = arith.mulf %88, %94 : vector<16x32xf32>
    %cst_32 = arith.constant 0.166666672 : f32
    %96 = vector.broadcast %cst_32 : f32 to vector<16x32xf32>
    %97 = arith.mulf %95, %96 : vector<16x32xf32>
    %98 = arith.truncf %97 : vector<16x32xf32> to vector<16x32xbf16>
    %c0_33 = arith.constant 0 : index
    %c0_34 = arith.constant 0 : index
    %99 = vector.load %arg4[%c0_33, %c0_34] : memref<32x32xbf16, #tpu.memory_space<vmem>>, vector<32x32xbf16>
    %cst_35 = arith.constant dense<0.000000e+00> : vector<16x32xf32>
    %100 = tpu.matmul %98, %99, %cst_35 {dimension_numbers = #tpu.dot_dimension_numbers<[1], [0], [0], [1], [0, 0, 1, 1], [], []>} : vector<16x32xbf16>, vector<32x32xbf16>, vector<16x32xf32> -> vector<16x32xf32>
    %c0_36 = arith.constant 0 : index
    %c0_37 = arith.constant 0 : index
    %101 = vector.load %arg5[%c0_36, %c0_37] : memref<1x32xf32, #tpu.memory_space<vmem>>, vector<1x32xf32>
    %102 = vector.broadcast %101 : vector<1x32xf32> to vector<16x32xf32>
    %103 = arith.addf %100, %102 : vector<16x32xf32>
    %104 = vector.shape_cast %103 : vector<16x32xf32> to vector<1x16x32xf32>
    %c0_38 = arith.constant 0 : index
    %c0_39 = arith.constant 0 : index
    %c0_40 = arith.constant 0 : index
    %105 = vector.load %arg6[%c0_38, %c0_39, %c0_40] : memref<1x16x32xf32, #tpu.memory_space<vmem>>, vector<1x16x32xf32>
    tpu.vector_store %arg6[%c0_38, %c0_39, %c0_40], %104 {strides = array<i32>} : memref<1x16x32xf32, #tpu.memory_space<vmem>>, vector<1x16x32xf32>,
    return
  }
  func.func @transform_0(%arg0: i32) -> (i32, i32, i32) {
    %c0_i32 = arith.constant 0 : i32
    %c0_i32_0 = arith.constant 0 : i32
    %c0_i32_1 = arith.constant 0 : i32
    return %arg0, %c0_i32, %c0_i32_0 : i32, i32, i32
  }
  func.func @transform_1(%arg0: i32) -> (i32, i32) {
    %c0_i32 = arith.constant 0 : i32
    %c0_i32_0 = arith.constant 0 : i32
    %c0_i32_1 = arith.constant 0 : i32
    return %c0_i32, %c0_i32_0 : i32, i32
  }
  func.func @transform_2(%arg0: i32) -> (i32, i32) {
    %c0_i32 = arith.constant 0 : i32
    %c0_i32_0 = arith.constant 0 : i32
    %c0_i32_1 = arith.constant 0 : i32
    return %c0_i32, %c0_i32_0 : i32, i32
  }
  func.func @transform_3(%arg0: i32) -> (i32, i32) {
    %c0_i32 = arith.constant 0 : i32
    %c0_i32_0 = arith.constant 0 : i32
    %c0_i32_1 = arith.constant 0 : i32
    return %c0_i32, %c0_i32_0 : i32, i32
  }
  func.func @transform_4(%arg0: i32) -> (i32, i32) {
    %c0_i32 = arith.constant 0 : i32
    %c0_i32_0 = arith.constant 0 : i32
    %c0_i32_1 = arith.constant 0 : i32
    return %c0_i32, %c0_i32_0 : i32, i32
  }
  func.func @transform_5(%arg0: i32) -> (i32, i32, i32) {
    %c0_i32 = arith.constant 0 : i32
    %c0_i32_0 = arith.constant 0 : i32
    %c0_i32_1 = arith.constant 0 : i32
    return %arg0, %c0_i32, %c0_i32_0 : i32, i32, i32
  }
}

</mosaic_0001>

<llo_original>
// kernel: tpu_custom_call.1
$region0: #{tpu_custom_call.1}
  #allocation0 [shape = 'u32[]', space=smem, size = 0x4, offset = 0x4, fixed_abs, tag = 'smem constant byte address 0x4 - core index']
  #allocation1 [shape = 'u32[72,128]{1,0:T(1,128)}', space=vmem, size = 0x9000, scoped, tag = 'internal scratch']
  #allocation2 [shape = 'f32[16,32]{1,0:T(8,128)}', space=vmem, size = 0x2000, scoped, tag = 'scratch operand']
  %s0 = inlined_call_operand.hbm [shape: f32[2,16,32], index: 0, kind: input, shape index: {}]
  %s1 = inlined_call_operand.hbm [shape: bf16[32,96], index: 1, kind: input, shape index: {}]
  %s2 = inlined_call_operand.vmem [shape: f32[1,96], index: 2, kind: input, shape index: {}]
  %s3 = inlined_call_operand.hbm [shape: bf16[32,32], index: 3, kind: input, shape index: {}]
  %s4 = inlined_call_operand.vmem [shape: f32[1,32], index: 4, kind: input, shape index: {}]
  %s5 = inlined_call_operand.hbm [shape: f32[2,16,32], index: 5, kind: output, shape index: {}]
  %s6 = sld [smem:[#allocation0]]
  $region65: #{tpu_custom_call.1} parent=0
    _
  %s8 = ssub.s32 1, %s6
  %s9 = scalar_select 0, %s8, %s6
  $region1: #{tpu_custom_call.1} parent=0
    #allocation3 [shape = 'u8[16384]{0}', space=vmem, size = 0x4000, scoped, tag = 'input window, operand 0']
    #allocation4 [shape = 's32[2]{0}', space=sflag, size = 0x8, scoped, tag = 'scoped memory for tpu_custom_call.1']
    #allocation5 [shape = 's32[2]{0}', space=sflag, size = 0x8, scoped, tag = 'scoped memory for tpu_custom_call.1']
    #allocation6 [shape = 'u8[8192]{0}', space=vmem, size = 0x2000, scoped, tag = 'input window, operand 1, single buffered']
    #allocation7 [shape = 's32[1]{0}', space=sflag, size = 0x4, scoped, tag = 'scoped memory for tpu_custom_call.1']
    #allocation8 [shape = 'u8[8192]{0}', space=vmem, size = 0x2000, scoped, tag = 'input window, operand 3, single buffered']
    #allocation9 [shape = 'u8[16384]{0}', space=vmem, size = 0x4000, scoped, tag = 'output window, operand 0']
    %10 = vsyncpa [#allocation4], 0
    %s11 = scalar_lea.sflag [#allocation4], 1
    %12 = vsyncpa %s11, 0
    %13 = vsyncpa [#allocation7], 0
    %14 = vsyncpa [#allocation5], 0
    %s15 = scalar_lea.sflag [#allocation5], 1
    %16 = vsyncpa %s15, 0
    loop: start=0, step=1, limit=4
    $region2: #{tpu_custom_call.1} parent=1 // loop_pre_header
      _
    $region3: #{tpu_custom_call.1} parent=1 // loop_header
      %s18 = sphi 0, %s22
      %p19 = scmp.ge.s32.totalorder %s18, 4
      %s28 = sphi 0, %s30
      %s31 = sphi 0, %s28
      %s32 = sphi 0, %s31
      %s48 = sphi 0, %s32
      %s52 = sphi 0, %s52
      %s54 = sphi 0, %s52
      %s55 = sphi 0, %s54
      %s69 = sphi 0, %s55
      %s73 = sphi 0, %s73
      %s75 = sphi 0, %s73
      %s76 = sphi 0, %s75
      %s90 = sphi 0, %s76
      %s94 = sphi 0, %s94
      %s96 = sphi 0, %s94
      %s97 = sphi 0, %s96
      %s111 = sphi 0, %s97
      %s115 = sphi 0, %s115
      %s117 = sphi 0, %s115
      %s118 = sphi 0, %s117
      %s132 = sphi 0, %s118
      %s138 = sphi 0, %s140
      %s141 = sphi 0, %s138
      %s142 = sphi 0, %s141
      %s158 = sphi 0, %s142
    $region4: #{tpu_custom_call.1} parent=1 // loop_header_branch
      %21 = sbr.rel (%p19) target = $region8
    $region5: #{tpu_custom_call.1} parent=1 // loop_body
      %s23 = ssub.s32 %s18, 1
      %s24 = ssub.s32 %s18, 2
      %s25 = sadd.s32 %s18, 1
      %s26 = ssub.s32 %s18, %s25
      %p27 = scmp.eq.s32.totalorder %s26, 0
      %s29 = sadd.s32 %s28, 1
      %s30 = scalar_select %p27, %s28, %s29
      %p33 = pneg %p27
      %p34 = scmp.eq.s32.totalorder %s18, 1
      %p35 = por %p33, %p34
      %p36 = scmp.ne.s32.totalorder %s28, %s31
      %p37 = scmp.eq.s32.totalorder %s18, 0
      %p38 = por %p36, %p37
      %p39 = scmp.ne.s32.totalorder %s28, %s31
      %p40 = scmp.eq.s32.totalorder %s23, 1
      %p41 = por %p39, %p40
      %p42 = scmp.ne.s32.totalorder %s31, %s32
      %p43 = scmp.eq.s32.totalorder %s23, 0
      %p44 = por %p42, %p43
      %p45 = scmp.ne.s32.totalorder %s31, %s32
      %p46 = scmp.eq.s32.totalorder %s24, 1
      %p47 = por %p45, %p46
      %p49 = scmp.ne.s32.totalorder %s32, %s48
      %p50 = scmp.eq.s32.totalorder %s24, 0
      %p51 = por %p49, %p50
      %s53 = sadd.s32 %s52, 1
      %p56 = scmp.eq.s32.totalorder %s18, 1
      %p57 = scmp.ne.s32.totalorder %s52, %s54
      %p58 = scmp.eq.s32.totalorder %s18, 0
      %p59 = por %p57, %p58
      %p60 = scmp.ne.s32.totalorder %s52, %s54
      %p61 = scmp.eq.s32.totalorder %s23, 1
      %p62 = por %p60, %p61
      %p63 = scmp.ne.s32.totalorder %s54, %s55
      %p64 = scmp.eq.s32.totalorder %s23, 0
      %p65 = por %p63, %p64
      %p66 = scmp.ne.s32.totalorder %s54, %s55
      %p67 = scmp.eq.s32.totalorder %s24, 1
      %p68 = por %p66, %p67
      %p70 = scmp.ne.s32.totalorder %s55, %s69
      %p71 = scmp.eq.s32.totalorder %s24, 0
      %p72 = por %p70, %p71
      %s74 = sadd.s32 %s73, 1
      %p77 = scmp.eq.s32.totalorder %s18, 1
      %p78 = scmp.ne.s32.totalorder %s73, %s75
      %p79 = scmp.eq.s32.totalorder %s18, 0
      %p80 = por %p78, %p79
      %p81 = scmp.ne.s32.totalorder %s73, %s75
      %p82 = scmp.eq.s32.totalorder %s23, 1
      %p83 = por %p81, %p82
      %p84 = scmp.ne.s32.totalorder %s75, %s76
      %p85 = scmp.eq.s32.totalorder %s23, 0
      %p86 = por %p84, %p85
      %p87 = scmp.ne.s32.totalorder %s75, %s76
      %p88 = scmp.eq.s32.totalorder %s24, 1
      %p89 = por %p87, %p88
      %p91 = scmp.ne.s32.totalorder %s76, %s90
      %p92 = scmp.eq.s32.totalorder %s24, 0
      %p93 = por %p91, %p92
      %s95 = sadd.s32 %s94, 1
      %p98 = scmp.eq.s32.totalorder %s18, 1
      %p99 = scmp.ne.s32.totalorder %s94, %s96
      %p100 = scmp.eq.s32.totalorder %s18, 0
      %p101 = por %p99, %p100
      %p102 = scmp.ne.s32.totalorder %s94, %s96
      %p103 = scmp.eq.s32.totalorder %s23, 1
      %p104 = por %p102, %p103
      %p105 = scmp.ne.s32.totalorder %s96, %s97
      %p106 = scmp.eq.s32.totalorder %s23, 0
      %p107 = por %p105, %p106
      %p108 = scmp.ne.s32.totalorder %s96, %s97
      %p109 = scmp.eq.s32.totalorder %s24, 1
      %p110 = por %p108, %p109
      %p112 = scmp.ne.s32.totalorder %s97, %s111
      %p113 = scmp.eq.s32.totalorder %s24, 0
      %p114 = por %p112, %p113
      %s116 = sadd.s32 %s115, 1
      %p119 = scmp.eq.s32.totalorder %s18, 1
      %p120 = scmp.ne.s32.totalorder %s115, %s117
      %p121 = scmp.eq.s32.totalorder %s18, 0
      %p122 = por %p120, %p121
      %p123 = scmp.ne.s32.totalorder %s115, %s117
      %p124 = scmp.eq.s32.totalorder %s23, 1
      %p125 = por %p123, %p124
      %p126 = scmp.ne.s32.totalorder %s117, %s118
      %p127 = scmp.eq.s32.totalorder %s23, 0
      %p128 = por %p126, %p127
      %p129 = scmp.ne.s32.totalorder %s117, %s118
      %p130 = scmp.eq.s32.totalorder %s24, 1
      %p131 = por %p129, %p130
      %p133 = scmp.ne.s32.totalorder %s118, %s132
      %p134 = scmp.eq.s32.totalorder %s24, 0
      %p135 = por %p133, %p134
      %s136 = ssub.s32 %s18, %s25
      %p137 = scmp.eq.s32.totalorder %s136, 0
      %s139 = sadd.s32 %s138, 1
      %s140 = scalar_select %p137, %s138, %s139
      %p143 = pneg %p137
      %p144 = scmp.eq.s32.totalorder %s18, 1
      %p145 = por %p143, %p144
      %p146 = scmp.ne.s32.totalorder %s138, %s141
      %p147 = scmp.eq.s32.totalorder %s18, 0
      %p148 = por %p146, %p147
      %p149 = scmp.ne.s32.totalorder %s138, %s141
      %p150 = scmp.eq.s32.totalorder %s23, 1
      %p151 = por %p149, %p150
      %p152 = scmp.ne.s32.totalorder %s141, %s142
      %p153 = scmp.eq.s32.totalorder %s23, 0
      %p154 = por %p152, %p153
      %p155 = scmp.ne.s32.totalorder %s141, %s142
      %p156 = scmp.eq.s32.totalorder %s24, 1
      %p157 = por %p155, %p156
      %p159 = scmp.ne.s32.totalorder %s142, %s158
      %p160 = scmp.eq.s32.totalorder %s24, 0
      %p161 = por %p159, %p160
      %p162 = scmp.le.s32.totalorder 1, %s18
      %p163 = scmp.lt.s32.totalorder %s18, 3
      %p164 = pnand %p162, %p163
      %p165 = pneg %p164
      // Predicated region
      $region9: #{tpu_custom_call.1} parent=5 // pred_check
        _
      $region10: #{tpu_custom_call.1} parent=5 // pred_check_branch
        %167 = sbr.rel (%p164) target = $region12
      $region11: #{tpu_custom_call.1} parent=5 // pred_region
        %s168 = ssub.s32 %s18, 1
        // Predicated region
        $region13: #{tpu_custom_call.1} parent=11 // pred_check
          %p169 = pneg %p65
        $region14: #{tpu_custom_call.1} parent=11 // pred_check_branch
          %171 = sbr.rel (%p169) target = $region16
        $region15: #{tpu_custom_call.1} parent=11 // pred_region
          %173 = vsyncadd [#allocation7], 0
          %s174 = sshll.u32 %s1, 4
          %s175 = int_to_ptr.hbm [resolvable:$true] %s174
          %s176 = sshll.u32 [#allocation6], 4
          %s177 = int_to_ptr.vmem [resolvable:$true] %s176
          %182 = dma.hbm_to_vmem [thread:$0]  %s175, 256, %s177, [#allocation7], 64, 64, 4
        $region16: #{tpu_custom_call.1} parent=11 // pred_fallthru
          _
        // Predicated region
        $region17: #{tpu_custom_call.1} parent=11 // pred_check
          %p183 = pneg %p86
        $region18: #{tpu_custom_call.1} parent=11 // pred_check_branch
          %185 = sbr.rel (%p183) target = $region20
        $region19: #{tpu_custom_call.1} parent=11 // pred_region
          _
        $region20: #{tpu_custom_call.1} parent=11 // pred_fallthru
          _
        // Predicated region
        $region21: #{tpu_custom_call.1} parent=11 // pred_check
          %p186 = pneg %p107
        $region22: #{tpu_custom_call.1} parent=11 // pred_check_branch
          %188 = sbr.rel (%p186) target = $region24
        $region23: #{tpu_custom_call.1} parent=11 // pred_region
          %190 = vsyncadd [#allocation7], 0
          %s191 = sshll.u32 %s3, 4
          %s192 = int_to_ptr.hbm [resolvable:$true] %s191
          %s193 = sshll.u32 [#allocation8], 4
          %s194 = int_to_ptr.vmem [resolvable:$true] %s193
          %199 = dma.hbm_to_vmem [thread:$0]  %s192, 256, %s194, [#allocation7], 64, 64, 4
        $region24: #{tpu_custom_call.1} parent=11 // pred_fallthru
          _
        // Predicated region
        $region25: #{tpu_custom_call.1} parent=11 // pred_check
          %p200 = pneg %p128
        $region26: #{tpu_custom_call.1} parent=11 // pred_check_branch
          %202 = sbr.rel (%p200) target = $region28
        $region27: #{tpu_custom_call.1} parent=11 // pred_region
          _
        $region28: #{tpu_custom_call.1} parent=11 // pred_fallthru
          _
      $region12: #{tpu_custom_call.1} parent=5 // pred_fallthru
        _
      %p203 = scmp.lt.s32.totalorder %s18, 2
      // Predicated region
      $region29: #{tpu_custom_call.1} parent=5 // pred_check
        %p204 = pneg %p203
      $region30: #{tpu_custom_call.1} parent=5 // pred_check_branch
        %206 = sbr.rel (%p204) target = $region32
      $region31: #{tpu_custom_call.1} parent=5 // pred_region
        // Predicated region
        $region33: #{tpu_custom_call.1} parent=31 // pred_check
          %p207 = pneg %p38
        $region34: #{tpu_custom_call.1} parent=31 // pred_check_branch
          %209 = sbr.rel (%p207) target = $region36
        $region35: #{tpu_custom_call.1} parent=31 // pred_region
          %s210 = sand.u32 %s28, 1
          %s211 = scalar_lea.sflag [#allocation4], %s210
          %s212 = sand.u32 %s28, 1
          %s213 = smul.addr %s212, 16
          %s214 = scalar_lea.vmem [#allocation3], %s213
          %216 = vsyncadd %s211, 0
          %s217 = smul.addr %s18, 2
          %s218 = smul.addr %s217, 8
          %s219 = scalar_lea.hbm %s0, %s218
          %s220 = sshll.u32 %s219, 4
          %s221 = int_to_ptr.hbm [resolvable:$true] %s220
          %s222 = sshll.u32 %s214, 4
          %s223 = int_to_ptr.vmem [resolvable:$true] %s222
          %228 = dma.hbm_to_vmem [thread:$0]  %s221, 256, %s223, %s211, 128, 128, 8
        $region36: #{tpu_custom_call.1} parent=31 // pred_fallthru
          _
      $region32: #{tpu_custom_call.1} parent=5 // pred_fallthru
        _
      %p229 = scmp.le.s32.totalorder 1, %s18
      %p230 = scmp.lt.s32.totalorder %s18, 3
      %p231 = pnand %p229, %p230
      %p232 = pneg %p231
      // Predicated region
      $region37: #{tpu_custom_call.1} parent=5 // pred_check
        _
      $region38: #{tpu_custom_call.1} parent=5 // pred_check_branch
        %234 = sbr.rel (%p231) target = $region40
      $region39: #{tpu_custom_call.1} parent=5 // pred_region
        %s235 = ssub.s32 %s18, 1
        %s236 = sand.u32 %s31, 1
        %s237 = scalar_lea.sflag [#allocation4], %s236
        %s238 = sand.u32 %s31, 1
        %s239 = smul.addr %s238, 16
        %s240 = scalar_lea.vmem [#allocation3], %s239
        // Predicated region
        $region41: #{tpu_custom_call.1} parent=39 // pred_check
          %p241 = pneg %p44
        $region42: #{tpu_custom_call.1} parent=39 // pred_check_branch
          %243 = sbr.rel (%p241) target = $region44
        $region43: #{tpu_custom_call.1} parent=39 // pred_region
          %245 = dma.done %s237, 256
        $region44: #{tpu_custom_call.1} parent=39 // pred_fallthru
          _
        // Predicated region
        $region45: #{tpu_custom_call.1} parent=39 // pred_check
          %p246 = pneg %p65
        $region46: #{tpu_custom_call.1} parent=39 // pred_check_branch
          %248 = sbr.rel (%p246) target = $region48
        $region47: #{tpu_custom_call.1} parent=39 // pred_region
          %250 = dma.done [#allocation7], 256
        $region48: #{tpu_custom_call.1} parent=39 // pred_fallthru
          _
        // Predicated region
        $region49: #{tpu_custom_call.1} parent=39 // pred_check
          %p251 = pneg %p107
        $region50: #{tpu_custom_call.1} parent=39 // pred_check_branch
          %253 = sbr.rel (%p251) target = $region52
        $region51: #{tpu_custom_call.1} parent=39 // pred_region
          %255 = dma.done [#allocation7], 256
        $region52: #{tpu_custom_call.1} parent=39 // pred_fallthru
          _
        %s256 = sand.u32 %s31, 1
        %s257 = scalar_lea.sflag [#allocation4], %s256
        %s258 = sand.u32 %s31, 1
        %s259 = smul.addr %s258, 16
        %s260 = scalar_lea.vmem [#allocation3], %s259
        %p261 = pneg %p44
        %p262 = pneg %p41
        %p263 = pneg %p65
        %p264 = pneg %p62
        %p265 = pneg %p86
        %p266 = pneg %p83
        %p267 = pneg %p107
        %p268 = pneg %p104
        %p269 = pneg %p128
        %p270 = pneg %p125
        %p271 = pneg %p154
        %p272 = pneg %p151
        %s273 = sand.u32 %s141, 1
        %s274 = scalar_lea.sflag [#allocation5], %s273
        %s275 = sand.u32 %s141, 1
        %s276 = smul.addr %s275, 16
        %s277 = scalar_lea.vmem [#allocation9], %s276
        %v279 = vld [vmem:[%s240] sm:$0xff]
        %v280 = vld [vmem:[%s240 + $0x8] sm:$0xff]
        %v281 = vpack.c.bf16 %v280, %v279
        %v282 = vld [vmem:[#allocation6] sm:$0xf]
        %v283 = vld [vmem:[#allocation6 + $0x4] sm:$0xf]
        %v284 = vld [vmem:[#allocation6 + $0x8] sm:$0xf]
        %v285 = vld [vmem:[#allocation6 + $0xc] sm:$0xf]
        %v286 = vld [vmem:[%s2] sm:$0x1]
        %v288 = vperm.slane %v286, 0
        %v294 = vunpack.c.l.b16 %v282
        %v295 = vunpack.c.l.b16 %v283
        %v296 = vunpack.c.l.b16 %v284
        %v297 = vunpack.c.l.b16 %v285
        %v298 = vpack.c.b16 %v295, %v294
        %v299 = vpack.c.b16 %v297, %v296
        %vm302 = vcmask 261120
        %v304 = vsel %vm302, %v281, 0
        %306 = vmatpush.bf16.msra.mxu0 0
        %307 = vmatpush.bf16.msra.mxu0 0
        %308 = vmatpush.bf16.msra.mxu0 0
        %309 = vmatpush.bf16.msra.mxu0 0
        %310 = vmatpush.bf16.msra.mxu0 0
        %311 = vmatpush.bf16.msra.mxu0 0
        %312 = vmatpush.bf16.msra.mxu0 %v299
        %313 = vmatpush.bf16.msra.mxu0 %v298
        %314 = vmatmul.bf16.gmra.mxu0 %v304
        %v315 = vpop.f32.mrf.mxu0
        %v316 = vadd.f32 %v288, %v315
        %v317 = vpop.f32.mrf.mxu0
        %v318 = vadd.f32 %v288, %v317
        %319 = vdwg.mxu0
        %v320 = vpack.c.bf16 %v318, %v316
        %322 = vrot.lane.b32.xlu0 %v320, 96
        %v323 = vpop.permute.xlu0 %322
        %vm324 = vcmask 64512
        %v326 = vsel %vm324, %v320, 0
        %v329 = vsel %vm324, %v323, 0
        %331 = vmatpush.bf16.xpose.msra.mxu0 0
        %332 = vmatpush.bf16.xpose.msra.mxu0 0
        %333 = vmatpush.bf16.xpose.msra.mxu0 0
        %334 = vmatpush.bf16.xpose.msra.mxu0 0
        %335 = vmatpush.bf16.xpose.msra.mxu0 0
        %336 = vmatpush.bf16.xpose.msra.mxu0 0
        %337 = vmatpush.bf16.xpose.msra.mxu0 0
        %338 = vmatpush.bf16.xpose.msra.mxu0 %v329
        %339 = vmatmul.bf16.gmra.mxu0 %v326
        %v340 = vpop.f32.mrf.mxu0
        %v341 = vadd.f32 0.0, %v340
        %v342 = vpop.f32.mrf.mxu0
        %v343 = vadd.f32 0.0, %v342
        %344 = vdwg.mxu0
        %vm345 = vcmask 130048
        %v346 = vsel %vm345, %v341, -inf
        %347 = vmax.xlane.f32.xlu0 %v346
        %v348 = vpop.xlane.xlu0 %347
        %v349 = vsel %vm345, %v343, -inf
        %350 = vmax.xlane.f32.xlu0 %v349
        %v351 = vpop.xlane.xlu0 %350
        %v352 = vsub.f32 %v341, %v348
        %v353 = vsub.f32 %v343, %v351
        %v354 = vmul.f32 %v352, 1.442695
        %v355 = vpow.pop %v354
        %v356 = vmul.f32 %v353, 1.442695
        %v357 = vpow.pop %v356
        %v358 = vsel %vm345, %v355, 0.0
        %359 = vadd.xlane.f32.xlu0 %v358
        %v360 = vpop.xlane.xlu0 %359
        %v361 = vsel %vm345, %v357, 0.0
        %362 = vadd.xlane.f32.xlu0 %v361
        %v363 = vpop.xlane.xlu0 %362
        %v364 = vpack.c.bf16 %v357, %v355
        %365 = vrot.lane.b32.xlu0 %v320, 64
        %v366 = vpop.permute.xlu0 %365
        %v369 = vsel %vm345, %v364, 0
        %371 = vmatpush.bf16.msra.mxu0 0
        %372 = vmatpush.bf16.msra.mxu0 0
        %373 = vmatpush.bf16.msra.mxu0 0
        %374 = vmatpush.bf16.msra.mxu0 0
        %375 = vmatpush.bf16.msra.mxu0 0
        %376 = vmatpush.bf16.msra.mxu0 0
        %377 = vmatpush.bf16.msra.mxu0 0
        %378 = vmatpush.bf16.msra.mxu0 %v366
        %379 = vmatmul.bf16.gmra.mxu0 %v369
        %v380 = vpop.f32.mrf.mxu0
        %v381 = vadd.f32 0.0, %v380
        %v382 = vpop.f32.mrf.mxu0
        %v383 = vadd.f32 0.0, %v382
        %384 = vdwg.mxu0
        %v385 = vrcp.pop %v360
        %v386 = vrcp.pop %v363
        %v387 = vmul.f32 %v381, %v385
        %v388 = vmul.f32 %v383, %v386
        %389 = vst.msk [vmem:[#allocation2] sm:$0xff] %vm324, %v387
        %390 = vst.msk [vmem:[#allocation2 + $0x8] sm:$0xff] %vm324, %v388
        %391 = vrot.lane.b32.xlu0 %v320, 120
        %v392 = vpop.permute.xlu0 %391
        %393 = vrot.lane.b32.xlu0 %v320, 88
        %v394 = vpop.permute.xlu0 %393
        %v396 = vsel %vm324, %v392, 0
        %v399 = vsel %vm324, %v394, 0
        %401 = vmatpush.bf16.xpose.msra.mxu0 0
        %402 = vmatpush.bf16.xpose.msra.mxu0 0
        %403 = vmatpush.bf16.xpose.msra.mxu0 0
        %404 = vmatpush.bf16.xpose.msra.mxu0 0
        %405 = vmatpush.bf16.xpose.msra.mxu0 0
        %406 = vmatpush.bf16.xpose.msra.mxu0 0
        %407 = vmatpush.bf16.xpose.msra.mxu0 0
        %408 = vmatpush.bf16.xpose.msra.mxu0 %v399
        %409 = vmatmul.bf16.gmra.mxu0 %v396
        %v410 = vpop.f32.mrf.mxu0
        %v411 = vadd.f32 0.0, %v410
        %v412 = vpop.f32.mrf.mxu0
        %v413 = vadd.f32 0.0, %v412
        %414 = vdwg.mxu0
        %v415 = vsel %vm345, %v411, -inf
        %416 = vmax.xlane.f32.xlu0 %v415
        %v417 = vpop.xlane.xlu0 %416
        %v418 = vsel %vm345, %v413, -inf
        %419 = vmax.xlane.f32.xlu0 %v418
        %v420 = vpop.xlane.xlu0 %419
        %v421 = vsub.f32 %v411, %v417
        %v422 = vsub.f32 %v413, %v420
        %v423 = vmul.f32 %v421, 1.442695
        %v424 = vpow.pop %v423
        %v425 = vmul.f32 %v422, 1.442695
        %v426 = vpow.pop %v425
        %v427 = vsel %vm345, %v424, 0.0
        %428 = vadd.xlane.f32.xlu0 %v427
        %v429 = vpop.xlane.xlu0 %428
        %v430 = vsel %vm345, %v426, 0.0
        %431 = vadd.xlane.f32.xlu0 %v430
        %v432 = vpop.xlane.xlu0 %431
        %v433 = vpack.c.bf16 %v426, %v424
        %434 = vrot.lane.b32.xlu0 %v320, 56
        %v435 = vpop.permute.xlu0 %434
        %v438 = vsel %vm345, %v433, 0
        %440 = vmatpush.bf16.msra.mxu0 0
        %441 = vmatpush.bf16.msra.mxu0 0
        %442 = vmatpush.bf16.msra.mxu0 0
        %443 = vmatpush.bf16.msra.mxu0 0
        %444 = vmatpush.bf16.msra.mxu0 0
        %445 = vmatpush.bf16.msra.mxu0 0
        %446 = vmatpush.bf16.msra.mxu0 0
        %447 = vmatpush.bf16.msra.mxu0 %v435
        %448 = vmatmul.bf16.gmra.mxu0 %v438
        %v449 = vpop.f32.mrf.mxu0
        %v450 = vadd.f32 0.0, %v449
        %v451 = vpop.f32.mrf.mxu0
        %v452 = vadd.f32 0.0, %v451
        %453 = vdwg.mxu0
        %v454 = vrcp.pop %v429
        %v455 = vrcp.pop %v432
        %v456 = vmul.f32 %v450, %v454
        %v457 = vmul.f32 %v452, %v455
        %460 = vrot.lane.b32.xlu0 %v456, 8
        %v461 = vpop.permute.xlu0 %460
        %462 = vrot.lane.b32.xlu0 %v457, 8
        %v463 = vpop.permute.xlu0 %462
        %vm466 = vcmask 130112
        %467 = vst.msk [vmem:[#allocation2] sm:$0xff] %vm466, %v461
        %468 = vst.msk [vmem:[#allocation2 + $0x8] sm:$0xff] %vm466, %v463
        %469 = vrot.lane.b32.xlu0 %v320, 112
        %v470 = vpop.permute.xlu0 %469
        %471 = vrot.lane.b32.xlu0 %v320, 80
        %v472 = vpop.permute.xlu0 %471
        %v474 = vsel %vm324, %v470, 0
        %v477 = vsel %vm324, %v472, 0
        %479 = vmatpush.bf16.xpose.msra.mxu0 0
        %480 = vmatpush.bf16.xpose.msra.mxu0 0
        %481 = vmatpush.bf16.xpose.msra.mxu0 0
        %482 = vmatpush.bf16.xpose.msra.mxu0 0
        %483 = vmatpush.bf16.xpose.msra.mxu0 0
        %484 = vmatpush.bf16.xpose.msra.mxu0 0
        %485 = vmatpush.bf16.xpose.msra.mxu0 0
        %486 = vmatpush.bf16.xpose.msra.mxu0 %v477
        %487 = vmatmul.bf16.gmra.mxu0 %v474
        %v488 = vpop.f32.mrf.mxu0
        %v489 = vadd.f32 0.0, %v488
        %v490 = vpop.f32.mrf.mxu0
        %v491 = vadd.f32 0.0, %v490
        %492 = vdwg.mxu0
        %v493 = vsel %vm345, %v489, -inf
        %494 = vmax.xlane.f32.xlu0 %v493
        %v495 = vpop.xlane.xlu0 %494
        %v496 = vsel %vm345, %v491, -inf
        %497 = vmax.xlane.f32.xlu0 %v496
        %v498 = vpop.xlane.xlu0 %497
        %v499 = vsub.f32 %v489, %v495
        %v500 = vsub.f32 %v491, %v498
        %v501 = vmul.f32 %v499, 1.442695
        %v502 = vpow.pop %v501
        %v503 = vmul.f32 %v500, 1.442695
        %v504 = vpow.pop %v503
        %v505 = vsel %vm345, %v502, 0.0
        %506 = vadd.xlane.f32.xlu0 %v505
        %v507 = vpop.xlane.xlu0 %506
        %v508 = vsel %vm345, %v504, 0.0
        %509 = vadd.xlane.f32.xlu0 %v508
        %v510 = vpop.xlane.xlu0 %509
        %v511 = vpack.c.bf16 %v504, %v502
        %512 = vrot.lane.b32.xlu0 %v320, 48
        %v513 = vpop.permute.xlu0 %512
        %v516 = vsel %vm345, %v511, 0
        %518 = vmatpush.bf16.msra.mxu0 0
        %519 = vmatpush.bf16.msra.mxu0 0
        %520 = vmatpush.bf16.msra.mxu0 0
        %521 = vmatpush.bf16.msra.mxu0 0
        %522 = vmatpush.bf16.msra.mxu0 0
        %523 = vmatpush.bf16.msra.mxu0 0
        %524 = vmatpush.bf16.msra.mxu0 0
        %525 = vmatpush.bf16.msra.mxu0 %v513
        %526 = vmatmul.bf16.gmra.mxu0 %v516
        %v527 = vpop.f32.mrf.mxu0
        %v528 = vadd.f32 0.0, %v527
        %v529 = vpop.f32.mrf.mxu0
        %v530 = vadd.f32 0.0, %v529
        %531 = vdwg.mxu0
        %v532 = vrcp.pop %v507
        %v533 = vrcp.pop %v510
        %v534 = vmul.f32 %v528, %v532
        %v535 = vmul.f32 %v530, %v533
        %538 = vrot.lane.b32.xlu0 %v534, 16
        %v539 = vpop.permute.xlu0 %538
        %540 = vrot.lane.b32.xlu0 %v535, 16
        %v541 = vpop.permute.xlu0 %540
        %vm544 = vcmask 195712
        %545 = vst.msk [vmem:[#allocation2] sm:$0xff] %vm544, %v539
        %546 = vst.msk [vmem:[#allocation2 + $0x8] sm:$0xff] %vm544, %v541
        %547 = vrot.lane.b32.xlu0 %v320, 104
        %v548 = vpop.permute.xlu0 %547
        %549 = vrot.lane.b32.xlu0 %v320, 72
        %v550 = vpop.permute.xlu0 %549
        %v552 = vsel %vm324, %v548, 0
        %v555 = vsel %vm324, %v550, 0
        %557 = vmatpush.bf16.xpose.msra.mxu0 0
        %558 = vmatpush.bf16.xpose.msra.mxu0 0
        %559 = vmatpush.bf16.xpose.msra.mxu0 0
        %560 = vmatpush.bf16.xpose.msra.mxu0 0
        %561 = vmatpush.bf16.xpose.msra.mxu0 0
        %562 = vmatpush.bf16.xpose.msra.mxu0 0
        %563 = vmatpush.bf16.xpose.msra.mxu0 0
        %564 = vmatpush.bf16.xpose.msra.mxu0 %v555
        %565 = vmatmul.bf16.gmra.mxu0 %v552
        %v566 = vpop.f32.mrf.mxu0
        %v567 = vadd.f32 0.0, %v566
        %v568 = vpop.f32.mrf.mxu0
        %v569 = vadd.f32 0.0, %v568
        %570 = vdwg.mxu0
        %v571 = vsel %vm345, %v567, -inf
        %572 = vmax.xlane.f32.xlu0 %v571
        %v573 = vpop.xlane.xlu0 %572
        %v574 = vsel %vm345, %v569, -inf
        %575 = vmax.xlane.f32.xlu0 %v574
        %v576 = vpop.xlane.xlu0 %575
        %v577 = vsub.f32 %v567, %v573
        %v578 = vsub.f32 %v569, %v576
        %v579 = vmul.f32 %v577, 1.442695
        %v580 = vpow.pop %v579
        %v581 = vmul.f32 %v578, 1.442695
        %v582 = vpow.pop %v581
        %v583 = vsel %vm345, %v580, 0.0
        %584 = vadd.xlane.f32.xlu0 %v583
        %v585 = vpop.xlane.xlu0 %584
        %v586 = vsel %vm345, %v582, 0.0
        %587 = vadd.xlane.f32.xlu0 %v586
        %v588 = vpop.xlane.xlu0 %587
        %v589 = vpack.c.bf16 %v582, %v580
        %590 = vrot.lane.b32.xlu0 %v320, 40
        %v591 = vpop.permute.xlu0 %590
        %v594 = vsel %vm345, %v589, 0
        %596 = vmatpush.bf16.msra.mxu0 0
        %597 = vmatpush.bf16.msra.mxu0 0
        %598 = vmatpush.bf16.msra.mxu0 0
        %599 = vmatpush.bf16.msra.mxu0 0
        %600 = vmatpush.bf16.msra.mxu0 0
        %601 = vmatpush.bf16.msra.mxu0 0
        %602 = vmatpush.bf16.msra.mxu0 0
        %603 = vmatpush.bf16.msra.mxu0 %v591
        %604 = vmatmul.bf16.gmra.mxu0 %v594
        %v605 = vpop.f32.mrf.mxu0
        %v606 = vadd.f32 0.0, %v605
        %v607 = vpop.f32.mrf.mxu0
        %v608 = vadd.f32 0.0, %v607
        %609 = vdwg.mxu0
        %v610 = vrcp.pop %v585
        %v611 = vrcp.pop %v588
        %v612 = vmul.f32 %v606, %v610
        %v613 = vmul.f32 %v608, %v611
        %616 = vrot.lane.b32.xlu0 %v612, 24
        %v617 = vpop.permute.xlu0 %616
        %618 = vrot.lane.b32.xlu0 %v613, 24
        %v619 = vpop.permute.xlu0 %618
        %vm622 = vcmask 261312
        %623 = vst.msk [vmem:[#allocation2] sm:$0xff] %vm622, %v617
        %624 = vst.msk [vmem:[#allocation2 + $0x8] sm:$0xff] %vm622, %v619
        %v625 = vld [vmem:[#allocation2] sm:$0xff]
        %v626 = vld [vmem:[#allocation2 + $0x8] sm:$0xff]
        %v627 = vadd.f32 %v625, 3.0
        %v628 = vadd.f32 %v626, 3.0
        %v629 = vmax.f32 %v627, 0.0
        %v630 = vmax.f32 %v628, 0.0
        %v631 = vmin.f32 %v629, 6.0
        %v632 = vmin.f32 %v630, 6.0
        %v633 = vmul.f32 %v625, %v631
        %v634 = vmul.f32 %v626, %v632
        %v635 = vmul.f32 %v633, 0.16666667
        %v636 = vmul.f32 %v634, 0.16666667
        %v637 = vpack.c.bf16 %v636, %v635
        %v638 = vld [vmem:[#allocation8] sm:$0xf]
        %v639 = vld [vmem:[#allocation8 + $0x4] sm:$0xf]
        %v640 = vld [vmem:[#allocation8 + $0x8] sm:$0xf]
        %v641 = vld [vmem:[#allocation8 + $0xc] sm:$0xf]
        %v642 = vld [vmem:[%s4] sm:$0x1]
        %v644 = vperm.slane %v642, 0
        %v650 = vunpack.c.l.b16 %v638
        %v651 = vunpack.c.l.b16 %v639
        %v652 = vunpack.c.l.b16 %v640
        %v653 = vunpack.c.l.b16 %v641
        %v654 = vpack.c.b16 %v651, %v650
        %v655 = vpack.c.b16 %v653, %v652
        %v659 = vsel %vm302, %v637, 0
        %661 = vmatpush.bf16.msra.mxu0 0
        %662 = vmatpush.bf16.msra.mxu0 0
        %663 = vmatpush.bf16.msra.mxu0 0
        %664 = vmatpush.bf16.msra.mxu0 0
        %665 = vmatpush.bf16.msra.mxu0 0
        %666 = vmatpush.bf16.msra.mxu0 0
        %667 = vmatpush.bf16.msra.mxu0 %v655
        %668 = vmatpush.bf16.msra.mxu0 %v654
        %669 = vmatmul.bf16.gmra.mxu0 %v659
        %v670 = vpop.f32.mrf.mxu0
        %v671 = vadd.f32 %v644, %v670
        %v672 = vpop.f32.mrf.mxu0
        %v673 = vadd.f32 %v644, %v672
        %674 = vdwg.mxu0
        %675 = vst.msk [vmem:[%s277] sm:$0xff] %vm302, %v671
        %676 = vst.msk [vmem:[%s277 + $0x8] sm:$0xff] %vm302, %v673
        %s677 = sand.u32 %s141, 1
        %s678 = scalar_lea.sflag [#allocation5], %s677
        %s679 = sand.u32 %s141, 1
        %s680 = smul.addr %s679, 16
        %s681 = scalar_lea.vmem [#allocation9], %s680
        // Predicated region
        $region53: #{tpu_custom_call.1} parent=39 // pred_check
          %p682 = pneg %p151
        $region54: #{tpu_custom_call.1} parent=39 // pred_check_branch
          %684 = sbr.rel (%p682) target = $region56
        $region55: #{tpu_custom_call.1} parent=39 // pred_region
          %686 = vsyncadd %s678, 0
          %s687 = smul.addr %s23, 2
          %s688 = smul.addr %s687, 8
          %s689 = scalar_lea.hbm %s5, %s688
          %s690 = sshll.u32 %s681, 4
          %s691 = int_to_ptr.vmem [resolvable:$true] %s690
          %s692 = sshll.u32 %s689, 4
          %s693 = int_to_ptr.hbm [resolvable:$true] %s692
          %698 = dma.vmem_to_hbm [thread:$0]  %s691, 256, %s693, %s678, 128, 128, 8
        $region56: #{tpu_custom_call.1} parent=39 // pred_fallthru
          _
      $region40: #{tpu_custom_call.1} parent=5 // pred_fallthru
        _
      %p699 = scmp.le.s32.totalorder 2, %s18
      // Predicated region
      $region57: #{tpu_custom_call.1} parent=5 // pred_check
        %p700 = pneg %p699
      $region58: #{tpu_custom_call.1} parent=5 // pred_check_branch
        %702 = sbr.rel (%p700) target = $region60
      $region59: #{tpu_custom_call.1} parent=5 // pred_region
        %s703 = ssub.s32 %s18, 2
        // Predicated region
        $region61: #{tpu_custom_call.1} parent=59 // pred_check
          %p704 = pneg %p157
        $region62: #{tpu_custom_call.1} parent=59 // pred_check_branch
          %706 = sbr.rel (%p704) target = $region64
        $region63: #{tpu_custom_call.1} parent=59 // pred_region
          %s707 = sand.u32 %s142, 1
          %s708 = scalar_lea.sflag [#allocation5], %s707
          %s709 = sand.u32 %s142, 1
          %s710 = smul.addr %s709, 16
          %s711 = scalar_lea.vmem [#allocation9], %s710
          %713 = dma.done %s708, 256
        $region64: #{tpu_custom_call.1} parent=59 // pred_fallthru
          _
      $region60: #{tpu_custom_call.1} parent=5 // pred_fallthru
        _
    $region6: #{tpu_custom_call.1} parent=1 // loop_footer
      %s22 = sadd.s32 1, %s18
    $region7: #{tpu_custom_call.1} parent=1 // loop_footer_branch
      %17 = sbr.rel target = $region3
    $region8: #{tpu_custom_call.1} parent=1 // loop_exit
      _
    %714 = vsyncpa [#allocation4], 1
    %s715 = scalar_lea.sflag [#allocation4], 1
    %716 = vsyncpa %s715, 1
    %717 = vsyncpa [#allocation7], 1
    %718 = vsyncpa [#allocation5], 1
    %s719 = scalar_lea.sflag [#allocation5], 1
    %720 = vsyncpa %s719, 1

</llo_original>
